<compile_context>
chip_gen: v7x
topology: tpu7x:2x2x1
jax: 0.10.0
libtpu: 0.0.40
codegen_flags: <defaults>
</compile_context>

<pallas_src>
import jax
import jax.numpy as jnp
from jax.experimental import pallas as pl
from jax.experimental.pallas import tpu as pltpu

_SUBLANE = 8
_LANE = 128
_SINGLE_BLOCK_BYTES = 8 << 20   # in+out byte gate for the no-grid fast path
_VMEM_LIMIT_BYTES = 32 << 20    # explicit scoped-VMEM limit, safe on v5e/v6e/v7x


def _block_byte_budget() -> int:
    """Per-block byte budget for the tiled path.

    ~2 MiB amortizes the ~0.35 us per-grid-step pipeline cost at v5e/v6e HBM
    bandwidth; v7x (~3.2 TB/s HBM) needs ~4 MiB blocks to keep DMA time
    dominant.  The hardware query is best-effort (falls back to 2 MiB).
    """
    budget = 2 << 20
    try:
        info = pltpu.get_tpu_info()
        desc = str(getattr(info, "chip_version", None) or info).lower()
        if "v7" in desc or "7x" in desc:
            budget = 4 << 20
    except Exception:
        pass
    return budget


def _lane_dense_view(t):
    """View a contiguous array as a lane-dense 2-D (rows, W) slab.

    The touch/copy ops are elementwise, so layout is free to change.  A wide
    last dim (large multiple of 128) is the biggest single lever: full-width
    unmasked stores and long contiguous DMA rows.
    """
    total = t.size
    for w in (8192, 4096, 2048, 1024, 512, 256, _LANE):
        if total % w == 0:
            return t.reshape(total // w, w)
    # Awkward sizes: keep the trailing dim (full-dim blocks are always legal),
    # or a single row for 1-D inputs.
    if t.ndim >= 2:
        return t.reshape(-1, t.shape[-1])
    return t.reshape(1, total)


def _row_tile(rows_total: int, width: int, itemsize: int, block_bytes: int) -> int:
    rows = block_bytes // max(1, width * itemsize)
    rows = max(_SUBLANE, (rows // _SUBLANE) * _SUBLANE)
    return min(rows, rows_total)


# ----------------------------------------------------------------------------
# Identity copy (kept for demonstration / exact-correctness checks).
# ----------------------------------------------------------------------------
def _identity_kernel(x_ref, o_ref):
    o_ref[...] = x_ref[...]


def pallas_identity(t, *, block_bytes=None, single_block_bytes=_SINGLE_BLOCK_BYTES):
    """Identity copy of `t` through VMEM on TPU (tiled, pipelined)."""
    orig_shape = t.shape
    x = _lane_dense_view(t)
    rows, width = x.shape
    nbytes = x.size * x.dtype.itemsize

    if 2 * nbytes <= single_block_bytes:
        # No-grid single-block form: no pipeline prologue/epilogue for a tiny
        # array; byte-gated so it can never exceed scoped VMEM on any chip.
        out = pl.pallas_call(
            _identity_kernel,
            out_shape=jax.ShapeDtypeStruct((rows, width), x.dtype),
            in_specs=[pl.BlockSpec(memory_space=pltpu.MemorySpace.VMEM)],
            out_specs=pl.BlockSpec(memory_space=pltpu.MemorySpace.VMEM),
        )(x)
        return out.reshape(orig_shape)

    bb = block_bytes if block_bytes is not None else _block_byte_budget()
    tile = _row_tile(rows, width, x.dtype.itemsize, bb)
    grid = (pl.cdiv(rows, tile),)
    out = pl.pallas_call(
        _identity_kernel,
        out_shape=jax.ShapeDtypeStruct((rows, width), x.dtype),
        grid=grid,
        in_specs=[pl.BlockSpec((tile, width), lambda i: (i, 0))],
        out_specs=pl.BlockSpec((tile, width), lambda i: (i, 0)),
        compiler_params=pltpu.CompilerParams(
            dimension_semantics=("parallel",),
            vmem_limit_bytes=_VMEM_LIMIT_BYTES,
        ),
    )(x)
    return out.reshape(orig_shape)


# ----------------------------------------------------------------------------
# Read-only checksum "touch" (debug path): sum of all elements -> (1, 1) f32.
# Halves HBM traffic vs. an identity copy (no writeback DMA stage).
# ----------------------------------------------------------------------------
def _checksum_kernel_single(x_ref, o_ref):
    o_ref[...] = jnp.sum(x_ref[...].astype(jnp.float32)).reshape(1, 1)


def _make_checksum_kernel(rows_total: int, row_tile: int):
    ragged = rows_total % row_tile != 0

    def kernel(x_ref, o_ref):
        i = pl.program_id(0)

        @pl.when(i == 0)
        def _():
            o_ref[...] = jnp.zeros_like(o_ref)

        x = x_ref[...].astype(jnp.float32)
        if ragged:
            # Mask rows past the true extent in the last (partial) block.
            row_ids = jax.lax.broadcasted_iota(jnp.int32, x.shape, 0) + i * row_tile
            x = jnp.where(row_ids < rows_total, x, 0.0)
        o_ref[...] += jnp.sum(x)

    return kernel


def pallas_checksum(t, *, block_bytes=None, single_block_bytes=_SINGLE_BLOCK_BYTES):
    """Read-only touch of `t`: sums all elements into a (1, 1) float32."""
    x = _lane_dense_view(t)
    rows, width = x.shape
    nbytes = x.size * x.dtype.itemsize
    out_shape = jax.ShapeDtypeStruct((1, 1), jnp.float32)

    if nbytes <= single_block_bytes // 2:
        return pl.pallas_call(
            _checksum_kernel_single,
            out_shape=out_shape,
            in_specs=[pl.BlockSpec(memory_space=pltpu.MemorySpace.VMEM)],
            out_specs=pl.BlockSpec(memory_space=pltpu.MemorySpace.VMEM),
        )(x)

    bb = block_bytes if block_bytes is not None else _block_byte_budget()
    tile = _row_tile(rows, width, x.dtype.itemsize, bb)
    grid_n = pl.cdiv(rows, tile)
    return pl.pallas_call(
        _make_checksum_kernel(rows, tile),
        out_shape=out_shape,
        grid=(grid_n,),
        in_specs=[pl.BlockSpec((tile, width), lambda i: (i, 0))],
        out_specs=pl.BlockSpec((1, 1), lambda i: (0, 0)),
        compiler_params=pltpu.CompilerParams(
            # Output block is resident (accumulated) across the grid axis, so
            # this axis must be "arbitrary", not "parallel".
            dimension_semantics=("arbitrary",),
            vmem_limit_bytes=_VMEM_LIMIT_BYTES,
        ),
    )(x)


# ----------------------------------------------------------------------------
# Module wrapper (semantics identical to the PyTorch stub).
# ----------------------------------------------------------------------------
class Trajectory:
    """JAX equivalent of the (stub) PyTorch Trajectory module.

    forward()/forward_grad() are pure stubs exactly like the reference and
    launch no device work.  With debug_touch=True the time tensor is run
    through the read-only Pallas checksum kernel (blocked on, so it cannot be
    silently DCE'd) while still returning the stub outputs.
    """

    def __init__(self, debug_touch: bool = False):
        # Reference __init__ defines no parameters.
        self.debug_touch = debug_touch

    def forward(self, t):
        if self.debug_touch:
            jax.block_until_ready(pallas_checksum(t))
        pos, quat = (None, None)
        return (pos, quat)

    # TODO(synk): forward_grad in the reference is also a stub returning five
    # None placeholders; no derivative math exists to translate.
    def forward_grad(self, t):
        if self.debug_touch:
            jax.block_until_ready(pallas_checksum(t))
        p, dpdt, dpdt2, q, dqdt = [None] * 5
        return (p, dpdt, dpdt2, q, dqdt)


if __name__ == "__main__":
    key = jax.random.PRNGKey(0)
    k_a, k_b = jax.random.split(key)

    # --- Single-block fast path: 8 "trajectory timestamps" x 128 lanes. ---
    t_small = jax.random.uniform(k_a, (8, 128), dtype=jnp.float32)
    out_small = pallas_identity(t_small)
    jax.block_until_ready(out_small)
    assert out_small.shape == t_small.shape and out_small.dtype == t_small.dtype
    assert bool(jnp.array_equal(out_small, t_small))

    cs_small = pallas_checksum(t_small)
    jax.block_until_ready(cs_small)
    assert cs_small.shape == (1, 1)
    assert bool(jnp.allclose(cs_small[0, 0], jnp.sum(t_small), rtol=1e-5, atol=1e-5))

    # --- Tiled path (forced via a small block budget so the demo stays at
    #     small shapes): (100, 96) f32 -> lane-dense (75, 128) slab, 16 KiB
    #     blocks -> 3 grid steps with a ragged (masked) last block. ---
    t_big = jax.random.uniform(k_b, (100, 96), dtype=jnp.float32)
    out_big = pallas_identity(t_big, block_bytes=16 * 1024, single_block_bytes=0)
    jax.block_until_ready(out_big)
    assert out_big.shape == t_big.shape
    assert bool(jnp.array_equal(out_big, t_big))

    cs_big = pallas_checksum(t_big, block_bytes=16 * 1024, single_block_bytes=0)
    jax.block_until_ready(cs_big)
    assert bool(jnp.allclose(cs_big[0, 0], jnp.sum(t_big), rtol=1e-5, atol=1e-5))

    # --- Module wrapper keeps the PyTorch stub semantics exactly. ---
    traj = Trajectory(debug_touch=True)
    pos, quat = traj.forward(t_small)
    assert pos is None and quat is None
    grads = traj.forward_grad(t_small)
    assert len(grads) == 5 and all(g is None for g in grads)

    print("KERNEL_OK")
</pallas_src>

<mosaic_0001>
module attributes {stable_mosaic.version = 11 : i64} {
  func.func @_identity_kernel(%arg0: memref<1x1024xf32, #tpu.memory_space<vmem>>, %arg1: memref<1x1024xf32, #tpu.memory_space<vmem>>) attributes {dimension_semantics = [], scalar_prefetch = 0 : i64, scratch_operands = 0 : i64, tpu.core_type = #tpu.core_type<tc>} {
    %c0 = arith.constant 0 : index
    %c0_0 = arith.constant 0 : index
    %0 = vector.load %arg0[%c0, %c0_0] : memref<1x1024xf32, #tpu.memory_space<vmem>>, vector<1x1024xf32>
    %c0_1 = arith.constant 0 : index
    %c0_2 = arith.constant 0 : index
    %1 = vector.load %arg1[%c0_1, %c0_2] : memref<1x1024xf32, #tpu.memory_space<vmem>>, vector<1x1024xf32>
    tpu.vector_store %arg1[%c0_1, %c0_2], %0 {strides = array<i32>} : memref<1x1024xf32, #tpu.memory_space<vmem>>, vector<1x1024xf32>,
    return
  }
}

</mosaic_0001>

<llo_original>
// kernel: tpu_custom_call.1
$region0: #{tpu_custom_call.1}
  #allocation0 [shape = 'u32[]', space=smem, size = 0x4, offset = 0x4, fixed_abs, tag = 'smem constant byte address 0x4 - core index']
  #allocation1 [shape = 'u32[144,128]{1,0:T(1,128)}', space=vmem, size = 0x12000, scoped, tag = 'internal scratch']
  %s0 = inlined_call_operand.hbm [shape: f32[1,1024], index: 0, kind: input, shape index: {}]
  %s1 = inlined_call_operand.hbm [shape: f32[1,1024], index: 1, kind: output, shape index: {}]
  %s2 = sld [smem:[#allocation0]]
  $region18: #{tpu_custom_call.1} parent=0
    _
  %s4 = ssub.s32 1, %s2
  %s5 = scalar_select 0, %s4, %s2
  $region1: #{tpu_custom_call.1} parent=0
    #allocation2 [shape = 'u8[4096]{0}', space=vmem, size = 0x1000, scoped, tag = 'input window, operand 0, single buffered']
    #allocation3 [shape = 's32[1]{0}', space=sflag, size = 0x4, scoped, tag = 'scoped memory for tpu_custom_call.1']
    #allocation4 [shape = 's32[1]{0}', space=sflag, size = 0x4, scoped, tag = 'scoped memory for tpu_custom_call.1']
    #allocation5 [shape = 'u8[4096]{0}', space=vmem, size = 0x1000, scoped, tag = 'output window, operand 0, single buffered']
    %6 = vsyncpa [#allocation3], 0
    %7 = vsyncpa [#allocation4], 0
    // Predicated region
    $region2: #{tpu_custom_call.1} parent=1 // pred_check
      _
    $region3: #{tpu_custom_call.1} parent=1 // pred_check_branch
      %9 = sbr.rel (0) target = $region5
    $region4: #{tpu_custom_call.1} parent=1 // pred_region
      %s11 = ssub.s32 128, 128
      %12 = vsyncadd [#allocation3], %s11
      %s14 = sshll.u32 [#allocation2], 4
      %s15 = int_to_ptr.vmem [resolvable:$true] %s14
      %17 = dma.hbm_to_vmem [thread:$0]  %s0, 128, %s15, [#allocation3]
    $region5: #{tpu_custom_call.1} parent=1 // pred_fallthru
      _
    // Predicated region
    $region6: #{tpu_custom_call.1} parent=1 // pred_check
      _
    $region7: #{tpu_custom_call.1} parent=1 // pred_check_branch
      %19 = sbr.rel (0) target = $region9
    $region8: #{tpu_custom_call.1} parent=1 // pred_region
      %20 = dma.done [#allocation3], 128
    $region9: #{tpu_custom_call.1} parent=1 // pred_fallthru
      _
    %v21 = vld [vmem:[#allocation2] sm:$0xff]
    %22 = vst [vmem:[#allocation5] sm:$0xff] %v21
    // Predicated region
    $region10: #{tpu_custom_call.1} parent=1 // pred_check
      _
    $region11: #{tpu_custom_call.1} parent=1 // pred_check_branch
      %24 = sbr.rel (0) target = $region13
    $region12: #{tpu_custom_call.1} parent=1 // pred_region
      %s26 = ssub.s32 128, 128
      %27 = vsyncadd [#allocation4], %s26
      %s29 = sshll.u32 [#allocation5], 4
      %s30 = int_to_ptr.vmem [resolvable:$true] %s29
      %32 = dma.vmem_to_hbm [thread:$0]  %s30, 128, %s1, [#allocation4]
    $region13: #{tpu_custom_call.1} parent=1 // pred_fallthru
      _
    // Predicated region
    $region14: #{tpu_custom_call.1} parent=1 // pred_check
      _
    $region15: #{tpu_custom_call.1} parent=1 // pred_check_branch
      %34 = sbr.rel (0) target = $region17
    $region16: #{tpu_custom_call.1} parent=1 // pred_region
      %35 = dma.done [#allocation4], 128
    $region17: #{tpu_custom_call.1} parent=1 // pred_fallthru
      _
    %36 = vsyncpa [#allocation3], 1
    %37 = vsyncpa [#allocation4], 1

</llo_original>
